<compile_context>
chip_gen: v7x
topology: tpu7x:2x2x1
jax: 0.10.0
libtpu: 0.0.40
codegen_flags: <defaults>
</compile_context>

<pallas_src>
import math
import functools

import numpy as np
import jax
import jax.numpy as jnp
from jax.experimental import pallas as pl
from jax.experimental.pallas import tpu as pltpu

_VMEM_LIMIT = 48 * 1024 * 1024  # explicit scoped-VMEM allowance (headroom on v7x's 64 MiB)


def _pick_tile(dim, cap, align):
    """Largest multiple of `align` that divides `dim` and is <= cap.

    Falls back to the full dimension (always layout-legal) only when that is
    not absurdly large; otherwise fails loudly instead of silently blowing VMEM.
    """
    if dim <= cap:
        return dim
    t = (cap // align) * align
    while t >= align:
        if dim % t == 0:
            return t
        t -= align
    if dim <= 4 * cap:
        # TODO(synk): ragged-tile masking for awkward non-divisible shapes.
        return dim
    raise ValueError(
        f"_pick_tile: no aligned divisor of {dim} <= {cap} (align={align}); "
        "pad the input or add ragged-tile handling.")


# ---------------------------------------------------------------------------
# Kernel 1 & 3: tiled, pipelined linear (matmul + bias), bf16 MXU / f32 acc
# ---------------------------------------------------------------------------
def _linear_kernel(x_ref, w_ref, b_ref, o_ref, acc_ref):
    k = pl.program_id(2)

    @pl.when(k == 0)
    def _():
        acc_ref[...] = jnp.zeros(acc_ref.shape, acc_ref.dtype)

    acc_ref[...] += jnp.dot(x_ref[...], w_ref[...],
                            preferred_element_type=jnp.float32)

    @pl.when(k == pl.num_programs(2) - 1)
    def _():
        o_ref[...] = (acc_ref[...] + b_ref[...]).astype(o_ref.dtype)


def pallas_linear(x2d, w, b, *, out_dtype=None, compute_dtype=jnp.bfloat16,
                  tm_cap=512, tn_cap=512, tk_cap=512):
    """x2d: (M, K), w: (K, N), b: (N,) -> (M, N)."""
    M, K = x2d.shape
    N = w.shape[1]
    if out_dtype is None:
        out_dtype = x2d.dtype

    # bf16 MXU operands (halves DMA bytes too); bias stays f32 for the f32 acc.
    xm = x2d.astype(compute_dtype)
    wm = w.astype(compute_dtype)
    bm = b.astype(jnp.float32).reshape(1, N)

    tm = _pick_tile(M, tm_cap, 8)      # sublane-aligned
    tn = _pick_tile(N, tn_cap, 128)    # lane-aligned
    tk = _pick_tile(K, tk_cap, 128)    # lane-aligned (x last dim)
    grid = (M // tm, N // tn, K // tk)
    return pl.pallas_call(
        _linear_kernel,
        out_shape=jax.ShapeDtypeStruct((M, N), out_dtype),
        grid_spec=pltpu.PrefetchScalarGridSpec(
            num_scalar_prefetch=0,
            grid=grid,
            in_specs=[
                pl.BlockSpec((tm, tk), lambda i, j, k: (i, k)),
                pl.BlockSpec((tk, tn), lambda i, j, k: (k, j)),
                pl.BlockSpec((1, tn), lambda i, j, k: (0, j)),
            ],
            out_specs=pl.BlockSpec((tm, tn), lambda i, j, k: (i, j)),
            scratch_shapes=[pltpu.VMEM((tm, tn), jnp.float32)],
        ),
        compiler_params=pltpu.CompilerParams(
            dimension_semantics=("parallel", "parallel", "arbitrary"),
            vmem_limit_bytes=_VMEM_LIMIT),
    )(xm, wm, bm)


# ---------------------------------------------------------------------------
# Kernel 2: flash-style attention, all heads of one (batch, q-tile) per step
# ---------------------------------------------------------------------------
def _flash_attn_kernel(q_ref, k_ref, v_ref, o_ref,
                       q_scr, m_ref, l_ref, acc_ref,
                       *, num_heads, head_dim, compute_dtype):
    ki = pl.program_id(2)

    @pl.when(ki == 0)
    def _():
        # Q-side prep is invariant along the KV axis (q block index map is
        # constant in ki): do it ONCE per (batch, q-tile) and stash in VMEM.
        # The 1/sqrt(head_dim) scale is already folded into the Q weights.
        tq = q_ref.shape[1]
        q = q_ref[0].reshape(tq, num_heads, head_dim)          # (tq, H, hd)
        q_scr[...] = jnp.swapaxes(q, 0, 1).astype(compute_dtype)  # (H, tq, hd)
        m_ref[...] = jnp.full(m_ref.shape, -jnp.inf, m_ref.dtype)
        l_ref[...] = jnp.zeros(l_ref.shape, l_ref.dtype)
        acc_ref[...] = jnp.zeros(acc_ref.shape, acc_ref.dtype)

    tk = k_ref.shape[1]
    k = jnp.swapaxes(k_ref[0].reshape(tk, num_heads, head_dim), 0, 1)  # (H, tk, hd)
    v = jnp.swapaxes(v_ref[0].reshape(tk, num_heads, head_dim), 0, 1)  # (H, tk, hd)

    # Logits: bf16 MXU operands, f32 accumulation. Batched over heads.
    s = jnp.einsum("hqd,hkd->hqk", q_scr[...], k.astype(compute_dtype),
                   preferred_element_type=jnp.float32)                 # (H, tq, tk)
    # TODO(synk): optional boolean mask and the reference's +/-1e9 clamp (a
    # no-op when mask=None with finite activations) are not implemented.

    # Online softmax stats kept in f32 (v5e has no bf16 VPU/EUP).
    m_prev = m_ref[...]                                                 # (H, tq, 1)
    m_new = jnp.maximum(m_prev, jnp.max(s, axis=-1, keepdims=True))
    alpha = jnp.exp(m_prev - m_new)
    p = jnp.exp(s - m_new)                                              # (H, tq, tk)
    l_ref[...] = alpha * l_ref[...] + jnp.sum(p, axis=-1, keepdims=True)
    acc_ref[...] = alpha * acc_ref[...] + jnp.einsum(
        "hqk,hkd->hqd", p.astype(compute_dtype), v.astype(compute_dtype),
        preferred_element_type=jnp.float32)                             # (H, tq, hd)
    m_ref[...] = m_new

    @pl.when(ki == pl.num_programs(2) - 1)
    def _():
        out = acc_ref[...] / l_ref[...]     # exact divide: once per (b, q-tile)
        out = jnp.swapaxes(out, 0, 1)       # (tq, H, hd)
        o_ref[0] = out.reshape(out.shape[0], -1).astype(o_ref.dtype)   # lane-dense


def pallas_flash_attention(qkv, num_heads, head_dim, *,
                           tq_cap=256, tk_cap=256, compute_dtype=jnp.bfloat16):
    """qkv: (B, S, 3*D) packed as [Q_allheads | K_allheads | V_allheads] -> (B, S, D)."""
    B, S, threeD = qkv.shape
    D = threeD // 3
    H = num_heads
    tq = _pick_tile(S, tq_cap, 8)
    tk = _pick_tile(S, tk_cap, 8)

    kern = functools.partial(_flash_attn_kernel, num_heads=H, head_dim=head_dim,
                             compute_dtype=compute_dtype)

    if D % 128 == 0:
        # Optimized path: slice Q / K / V straight out of the packed activation
        # via the last-dim BLOCK index (0/1/2). No over-fetch, no extra HBM pass.
        operands = (qkv, qkv, qkv)
        q_spec = pl.BlockSpec((1, tq, D), lambda b, qi, ki: (b, qi, 0))
        k_spec = pl.BlockSpec((1, tk, D), lambda b, qi, ki: (b, ki, 1))
        v_spec = pl.BlockSpec((1, tk, D), lambda b, qi, ki: (b, ki, 2))
    else:
        # Fallback for lane-unaligned D: materialize q/k/v once in JAX so every
        # block's last dim equals the full array extent (always layout-legal).
        q, k, v = jnp.split(qkv, 3, axis=-1)
        operands = (q, k, v)
        q_spec = pl.BlockSpec((1, tq, D), lambda b, qi, ki: (b, qi, 0))
        k_spec = pl.BlockSpec((1, tk, D), lambda b, qi, ki: (b, ki, 0))
        v_spec = pl.BlockSpec((1, tk, D), lambda b, qi, ki: (b, ki, 0))

    o_spec = pl.BlockSpec((1, tq, D), lambda b, qi, ki: (b, qi, 0))

    return pl.pallas_call(
        kern,
        out_shape=jax.ShapeDtypeStruct((B, S, D), qkv.dtype),
        grid_spec=pltpu.PrefetchScalarGridSpec(
            num_scalar_prefetch=0,
            grid=(B, S // tq, S // tk),          # kv (reduction) axis last
            in_specs=[q_spec, k_spec, v_spec],
            out_specs=o_spec,
            scratch_shapes=[
                pltpu.VMEM((H, tq, head_dim), compute_dtype),   # hoisted Q
                pltpu.VMEM((H, tq, 1), jnp.float32),            # running max m
                pltpu.VMEM((H, tq, 1), jnp.float32),            # running sum l
                pltpu.VMEM((H, tq, head_dim), jnp.float32),     # accumulator
            ],
        ),
        compiler_params=pltpu.CompilerParams(
            # (B, qi) both parallel -> v7x's two TensorCores both get work.
            dimension_semantics=("parallel", "parallel", "arbitrary"),
            vmem_limit_bytes=_VMEM_LIMIT),
    )(*operands)


# ---------------------------------------------------------------------------
# One-time weight prep: per-head [q|k|v] columns -> [Q_all | K_all | V_all],
# with 1/sqrt(head_dim) folded into the Q columns. (In production: do at init.)
# ---------------------------------------------------------------------------
def _repack_qkv_weights(w_qkv, b_qkv, num_heads, head_dim):
    d_model = num_heads * head_dim
    cols = np.arange(3 * d_model).reshape(num_heads, 3, head_dim)   # [h, chunk, d]
    perm = jnp.asarray(cols.transpose(1, 0, 2).reshape(-1))         # [chunk, h, d]
    scale = jnp.concatenate([
        jnp.full((d_model,), 1.0 / math.sqrt(head_dim), w_qkv.dtype),
        jnp.ones((2 * d_model,), w_qkv.dtype)])
    w = w_qkv[:, perm] * scale[None, :]
    b = b_qkv[perm] * scale
    return w, b


# ---------------------------------------------------------------------------
# Full module forward
# ---------------------------------------------------------------------------
def multi_head_attention(x, params, num_heads, *, compute_dtype=jnp.bfloat16):
    """x: (B, S, d_model) -> (B, S, d_model). Mirrors MultiHeadAttention.forward."""
    B, S, D = x.shape
    assert D % num_heads == 0
    hd = D // num_heads

    w_qkv, b_qkv = _repack_qkv_weights(params["w_qkv"], params["b_qkv"],
                                       num_heads, hd)

    # QKV projection (bf16 MXU, f32 acc), activation produced in bf16.
    qkv = pallas_linear(x.reshape(B * S, D), w_qkv, b_qkv,
                        out_dtype=compute_dtype, compute_dtype=compute_dtype)
    qkv = qkv.reshape(B, S, 3 * D)       # free contiguous reshape

    # Attention (flash-style, all heads per step), output already (B, S, D).
    vals = pallas_flash_attention(qkv, num_heads, hd, compute_dtype=compute_dtype)

    # Output projection back to f32.
    out = pallas_linear(vals.reshape(B * S, D), params["w_out"], params["b_out"],
                        out_dtype=jnp.float32, compute_dtype=compute_dtype)
    return out.reshape(B, S, D)


# ---------------------------------------------------------------------------
# Deterministic parameter init (matches nn.Linear shapes; synthetic weights)
# ---------------------------------------------------------------------------
def init_params(key, d_model):
    k1, k2, k3, k4 = jax.random.split(key, 4)
    bound = 1.0 / math.sqrt(d_model)
    return {
        # stored as (in, out) = torch_weight.T
        "w_qkv": jax.random.uniform(k1, (d_model, 3 * d_model), jnp.float32,
                                    -bound, bound),
        "b_qkv": jax.random.uniform(k2, (3 * d_model,), jnp.float32, -bound, bound),
        "w_out": jax.random.uniform(k3, (d_model, d_model), jnp.float32,
                                    -bound, bound),
        "b_out": jax.random.uniform(k4, (d_model,), jnp.float32, -bound, bound),
    }


# Pure-JAX f32 reference mirroring the PyTorch module exactly
def reference_mha(x, params, num_heads):
    B, S, D = x.shape
    hd = D // num_heads
    qkv = x.reshape(B * S, D) @ params["w_qkv"] + params["b_qkv"]
    qkv = qkv.reshape(B, S, num_heads, 3 * hd).transpose(0, 2, 1, 3)
    q, k, v = jnp.split(qkv, 3, axis=-1)
    scores = jnp.einsum("bhqd,bhkd->bhqk", q, k) / math.sqrt(hd)
    scores = jnp.clip(scores, -1.0e9, 1.0e9)
    attn = jax.nn.softmax(scores, axis=-1)
    vals = jnp.einsum("bhqk,bhkd->bhqd", attn, v)
    vals = vals.transpose(0, 2, 1, 3).reshape(B * S, D)
    out = vals @ params["w_out"] + params["b_out"]
    return out.reshape(B, S, D)


if __name__ == "__main__":
    # Small but layout-friendly: d_model=128 (lane-aligned), 4 heads of 32.
    B, S, D, H = 2, 8, 128, 4
    key = jax.random.PRNGKey(0)
    kx, kp = jax.random.split(key)
    x = jax.random.normal(kx, (B, S, D), jnp.float32)
    params = init_params(kp, D)

    out = multi_head_attention(x, params, H)
    out = jax.block_until_ready(out)

    ref = reference_mha(x, params, H)
    assert out.shape == (B, S, D)
    # Tolerance accounts for bf16 MXU operands (f32 accumulation / f32 softmax).
    assert jnp.allclose(out, ref, atol=3e-2, rtol=3e-2), "mismatch vs reference"

    print("KERNEL_OK")
</pallas_src>

<mosaic_0001>
module attributes {stable_mosaic.version = 11 : i64} {
  func.func @_linear_kernel(%arg0: i32, %arg1: i32, %arg2: i32, %arg3: memref<16x128xbf16, #tpu.memory_space<vmem>>, %arg4: memref<128x384xbf16, #tpu.memory_space<vmem>>, %arg5: memref<1x384xf32, #tpu.memory_space<vmem>>, %arg6: memref<16x384xbf16, #tpu.memory_space<vmem>>, %arg7: memref<16x384xf32, #tpu.memory_space<vmem>>) attributes {dimension_semantics = [#tpu.dimension_semantics<parallel>, #tpu.dimension_semantics<parallel>, #tpu.dimension_semantics<arbitrary>], iteration_bounds = array<i64: 1, 1, 1>, scalar_prefetch = 0 : i64, scratch_operands = 1 : i64, tpu.core_type = #tpu.core_type<tc>, window_params = [{transform_indices = @transform_0, window_bounds = array<i64: 16, 128>}, {transform_indices = @transform_1, window_bounds = array<i64: 128, 384>}, {transform_indices = @transform_2, window_bounds = array<i64: 1, 384>}, {transform_indices = @transform_3, window_bounds = array<i64: 16, 384>}]} {
    %c0_i32 = arith.constant 0 : i32
    %0 = arith.cmpi eq, %arg2, %c0_i32 : i32
    %1 = arith.extui %0 : i1 to i32
    %c0_i32_0 = arith.constant 0 : i32
    %2 = arith.cmpi ne, %1, %c0_i32_0 : i32
    scf.if %2 {
      %cst_10 = arith.constant 0.000000e+00 : f32
      %12 = vector.broadcast %cst_10 : f32 to vector<16x384xf32>
      %c0_11 = arith.constant 0 : index
      %c0_12 = arith.constant 0 : index
      %13 = vector.load %arg7[%c0_11, %c0_12] : memref<16x384xf32, #tpu.memory_space<vmem>>, vector<16x384xf32>
      tpu.vector_store %arg7[%c0_11, %c0_12], %12 {strides = array<i32>} : memref<16x384xf32, #tpu.memory_space<vmem>>, vector<16x384xf32>,
    } else {
    }
    %c0 = arith.constant 0 : index
    %c0_1 = arith.constant 0 : index
    %3 = vector.load %arg7[%c0, %c0_1] : memref<16x384xf32, #tpu.memory_space<vmem>>, vector<16x384xf32>
    %c0_2 = arith.constant 0 : index
    %c0_3 = arith.constant 0 : index
    %4 = vector.load %arg3[%c0_2, %c0_3] : memref<16x128xbf16, #tpu.memory_space<vmem>>, vector<16x128xbf16>
    %c0_4 = arith.constant 0 : index
    %c0_5 = arith.constant 0 : index
    %5 = vector.load %arg4[%c0_4, %c0_5] : memref<128x384xbf16, #tpu.memory_space<vmem>>, vector<128x384xbf16>
    %cst = arith.constant dense<0.000000e+00> : vector<16x384xf32>
    %6 = tpu.matmul %4, %5, %cst {dimension_numbers = #tpu.dot_dimension_numbers<[1], [0], [0], [1], [0, 0, 1, 1], [], []>} : vector<16x128xbf16>, vector<128x384xbf16>, vector<16x384xf32> -> vector<16x384xf32>
    %7 = arith.addf %3, %6 : vector<16x384xf32>
    %c0_6 = arith.constant 0 : index
    %c0_7 = arith.constant 0 : index
    %8 = vector.load %arg7[%c0_6, %c0_7] : memref<16x384xf32, #tpu.memory_space<vmem>>, vector<16x384xf32>
    tpu.vector_store %arg7[%c0_6, %c0_7], %7 {strides = array<i32>} : memref<16x384xf32, #tpu.memory_space<vmem>>, vector<16x384xf32>,
    %c0_i32_8 = arith.constant 0 : i32
    %9 = arith.cmpi eq, %arg2, %c0_i32_8 : i32
    %10 = arith.extui %9 : i1 to i32
    %c0_i32_9 = arith.constant 0 : i32
    %11 = arith.cmpi ne, %10, %c0_i32_9 : i32
    scf.if %11 {
      %c0_10 = arith.constant 0 : index
      %c0_11 = arith.constant 0 : index
      %12 = vector.load %arg7[%c0_10, %c0_11] : memref<16x384xf32, #tpu.memory_space<vmem>>, vector<16x384xf32>
      %c0_12 = arith.constant 0 : index
      %c0_13 = arith.constant 0 : index
      %13 = vector.load %arg5[%c0_12, %c0_13] : memref<1x384xf32, #tpu.memory_space<vmem>>, vector<1x384xf32>
      %14 = vector.broadcast %13 : vector<1x384xf32> to vector<16x384xf32>
      %15 = arith.addf %12, %14 : vector<16x384xf32>
      %16 = arith.truncf %15 : vector<16x384xf32> to vector<16x384xbf16>
      %c0_14 = arith.constant 0 : index
      %c0_15 = arith.constant 0 : index
      %17 = vector.load %arg6[%c0_14, %c0_15] : memref<16x384xbf16, #tpu.memory_space<vmem>>, vector<16x384xbf16>
      tpu.vector_store %arg6[%c0_14, %c0_15], %16 {strides = array<i32>} : memref<16x384xbf16, #tpu.memory_space<vmem>>, vector<16x384xbf16>,
    } else {
    }
    return
  }
  func.func @transform_0(%arg0: i32, %arg1: i32, %arg2: i32) -> (i32, i32) {
    %c0_i32 = arith.constant 0 : i32
    return %arg0, %arg2 : i32, i32
  }
  func.func @transform_1(%arg0: i32, %arg1: i32, %arg2: i32) -> (i32, i32) {
    %c0_i32 = arith.constant 0 : i32
    return %arg2, %arg1 : i32, i32
  }
  func.func @transform_2(%arg0: i32, %arg1: i32, %arg2: i32) -> (i32, i32) {
    %c0_i32 = arith.constant 0 : i32
    %c0_i32_0 = arith.constant 0 : i32
    return %c0_i32, %arg1 : i32, i32
  }
  func.func @transform_3(%arg0: i32, %arg1: i32, %arg2: i32) -> (i32, i32) {
    %c0_i32 = arith.constant 0 : i32
    return %arg0, %arg1 : i32, i32
  }
}

</mosaic_0001>

<llo_original>
// kernel: tpu_custom_call.1
$region0: #{tpu_custom_call.1}
  #allocation0 [shape = 'u32[]', space=smem, size = 0x4, offset = 0x4, fixed_abs, tag = 'smem constant byte address 0x4 - core index']
  #allocation1 [shape = 'u32[144,128]{1,0:T(1,128)}', space=vmem, size = 0x12000, scoped, tag = 'internal scratch']
  #allocation2 [shape = 'f32[16,384]{1,0:T(8,128)}', space=vmem, size = 0x6000, scoped, tag = 'scratch operand']
  %s0 = inlined_call_operand.hbm [shape: bf16[16,128], index: 0, kind: input, shape index: {}]
  %s1 = inlined_call_operand.hbm [shape: bf16[128,384], index: 1, kind: input, shape index: {}]
  %s2 = inlined_call_operand.vmem [shape: f32[1,384], index: 2, kind: input, shape index: {}]
  %s3 = inlined_call_operand.hbm [shape: bf16[16,384], index: 3, kind: output, shape index: {}]
  %s4 = sld [smem:[#allocation0]]
  $region38: #{tpu_custom_call.1} parent=0
    _
  %s6 = ssub.s32 1, %s4
  %s7 = scalar_select 0, %s6, %s4
  $region1: #{tpu_custom_call.1} parent=0
    #allocation3 [shape = 'u8[4096]{0}', space=vmem, size = 0x1000, scoped, tag = 'input window, operand 0, single buffered']
    #allocation4 [shape = 's32[1]{0}', space=sflag, size = 0x4, scoped, tag = 'scoped memory for tpu_custom_call.1']
    #allocation5 [shape = 's32[1]{0}', space=sflag, size = 0x4, scoped, tag = 'scoped memory for tpu_custom_call.1']
    #allocation6 [shape = 'u8[98304]{0}', space=vmem, size = 0x18000, scoped, tag = 'input window, operand 1, single buffered']
    #allocation7 [shape = 's32[1]{0}', space=sflag, size = 0x4, scoped, tag = 'scoped memory for tpu_custom_call.1']
    #allocation8 [shape = 'u8[12288]{0}', space=vmem, size = 0x3000, scoped, tag = 'output window, operand 0, single buffered']
    %8 = vsyncpa [#allocation4], 0
    %9 = vsyncpa [#allocation7], 0
    %10 = vsyncpa [#allocation5], 0
    // Predicated region
    $region2: #{tpu_custom_call.1} parent=1 // pred_check
      _
    $region3: #{tpu_custom_call.1} parent=1 // pred_check_branch
      %12 = sbr.rel (0) target = $region5
    $region4: #{tpu_custom_call.1} parent=1 // pred_region
      %s14 = ssub.s32 128, 128
      %15 = vsyncadd [#allocation4], %s14
      %s16 = sshll.u32 [#allocation3], 4
      %s17 = int_to_ptr.vmem [resolvable:$true] %s16
      %22 = dma.hbm_to_vmem [thread:$0]  %s0, 128, %s17, [#allocation4], 64, 64, 4
    $region5: #{tpu_custom_call.1} parent=1 // pred_fallthru
      _
    // Predicated region
    $region6: #{tpu_custom_call.1} parent=1 // pred_check
      _
    $region7: #{tpu_custom_call.1} parent=1 // pred_check_branch
      %24 = sbr.rel (0) target = $region9
    $region8: #{tpu_custom_call.1} parent=1 // pred_region
      %s26 = ssub.s32 3072, 3072
      %27 = vsyncadd [#allocation7], %s26
      %s28 = sshll.u32 [#allocation6], 4
      %s29 = int_to_ptr.vmem [resolvable:$true] %s28
      %34 = dma.hbm_to_vmem [thread:$0]  %s1, 3072, %s29, [#allocation7], 192, 192, 12
    $region9: #{tpu_custom_call.1} parent=1 // pred_fallthru
      _
    // Predicated region
    $region10: #{tpu_custom_call.1} parent=1 // pred_check
      _
    $region11: #{tpu_custom_call.1} parent=1 // pred_check_branch
      %36 = sbr.rel (0) target = $region13
    $region12: #{tpu_custom_call.1} parent=1 // pred_region
      _
    $region13: #{tpu_custom_call.1} parent=1 // pred_fallthru
      _
    // Predicated region
    $region14: #{tpu_custom_call.1} parent=1 // pred_check
      _
    $region15: #{tpu_custom_call.1} parent=1 // pred_check_branch
      %38 = sbr.rel (0) target = $region17
    $region16: #{tpu_custom_call.1} parent=1 // pred_region
      %39 = dma.done [#allocation4], 128
    $region17: #{tpu_custom_call.1} parent=1 // pred_fallthru
      _
    // Predicated region
    $region18: #{tpu_custom_call.1} parent=1 // pred_check
      _
    $region19: #{tpu_custom_call.1} parent=1 // pred_check_branch
      %41 = sbr.rel (0) target = $region21
    $region20: #{tpu_custom_call.1} parent=1 // pred_region
      %42 = dma.done [#allocation7], 3072
    $region21: #{tpu_custom_call.1} parent=1 // pred_fallthru
      _
    %p44 = scmp.eq.s32.totalorder 0, 0
    // Predicated region
    $region22: #{tpu_custom_call.1} parent=1 // pred_check
      %p45 = pneg %p44
    $region23: #{tpu_custom_call.1} parent=1 // pred_check_branch
      %47 = sbr.rel (%p45) target = $region25
    $region24: #{tpu_custom_call.1} parent=1 // pred_region
      %48 = vst [vmem:[#allocation2] sm:$0xff] 0.0
      %49 = vst [vmem:[#allocation2 + $0x8] sm:$0xff] 0.0
      %50 = vst [vmem:[#allocation2 + $0x10] sm:$0xff] 0.0
      %51 = vst [vmem:[#allocation2 + $0x18] sm:$0xff] 0.0
      %52 = vst [vmem:[#allocation2 + $0x20] sm:$0xff] 0.0
      %53 = vst [vmem:[#allocation2 + $0x28] sm:$0xff] 0.0
    $region25: #{tpu_custom_call.1} parent=1 // pred_fallthru
      _
    %v54 = vld [vmem:[#allocation2] sm:$0xff]
    %v55 = vld [vmem:[#allocation2 + $0x8] sm:$0xff]
    %v56 = vld [vmem:[#allocation2 + $0x10] sm:$0xff]
    %v57 = vld [vmem:[#allocation2 + $0x18] sm:$0xff]
    %v58 = vld [vmem:[#allocation2 + $0x20] sm:$0xff]
    %v59 = vld [vmem:[#allocation2 + $0x28] sm:$0xff]
    %v60 = vld [vmem:[#allocation3] sm:$0xf]
    %v61 = vld [vmem:[#allocation3 + $0x4] sm:$0xf]
    %v62 = vld [vmem:[#allocation6] sm:$0xff]
    %v63 = vld [vmem:[#allocation6 + $0x8] sm:$0xf]
    %v64 = vld [vmem:[#allocation6 + $0xc] sm:$0xff]
    %v65 = vld [vmem:[#allocation6 + $0x14] sm:$0xf]
    %v66 = vld [vmem:[#allocation6 + $0x18] sm:$0xff]
    %v67 = vld [vmem:[#allocation6 + $0x20] sm:$0xf]
    %v68 = vld [vmem:[#allocation6 + $0x24] sm:$0xff]
    %v69 = vld [vmem:[#allocation6 + $0x2c] sm:$0xf]
    %v70 = vld [vmem:[#allocation6 + $0x30] sm:$0xff]
    %v71 = vld [vmem:[#allocation6 + $0x38] sm:$0xf]
    %v72 = vld [vmem:[#allocation6 + $0x3c] sm:$0xff]
    %v73 = vld [vmem:[#allocation6 + $0x44] sm:$0xf]
    %v74 = vld [vmem:[#allocation6 + $0x48] sm:$0xff]
    %v75 = vld [vmem:[#allocation6 + $0x50] sm:$0xf]
    %v76 = vld [vmem:[#allocation6 + $0x54] sm:$0xff]
    %v77 = vld [vmem:[#allocation6 + $0x5c] sm:$0xf]
    %v78 = vld [vmem:[#allocation6 + $0x60] sm:$0xff]
    %v79 = vld [vmem:[#allocation6 + $0x68] sm:$0xf]
    %v80 = vld [vmem:[#allocation6 + $0x6c] sm:$0xff]
    %v81 = vld [vmem:[#allocation6 + $0x74] sm:$0xf]
    %v82 = vld [vmem:[#allocation6 + $0x78] sm:$0xff]
    %v83 = vld [vmem:[#allocation6 + $0x80] sm:$0xf]
    %v84 = vld [vmem:[#allocation6 + $0x84] sm:$0xff]
    %v85 = vld [vmem:[#allocation6 + $0x8c] sm:$0xf]
    %v86 = vld [vmem:[#allocation6 + $0x90] sm:$0xff]
    %v87 = vld [vmem:[#allocation6 + $0x98] sm:$0xf]
    %v88 = vld [vmem:[#allocation6 + $0x9c] sm:$0xff]
    %v89 = vld [vmem:[#allocation6 + $0xa4] sm:$0xf]
    %v90 = vld [vmem:[#allocation6 + $0xa8] sm:$0xff]
    %v91 = vld [vmem:[#allocation6 + $0xb0] sm:$0xf]
    %v92 = vld [vmem:[#allocation6 + $0xb4] sm:$0xff]
    %v93 = vld [vmem:[#allocation6 + $0xbc] sm:$0xf]
    %v96 = vunpack.c.l.b16 %v60
    %v97 = vunpack.c.l.b16 %v61
    %v98 = vpack.c.b16 %v97, %v96
    %v132 = vunpack.c.l.b16 %v62
    %v133 = vunpack.c.h.b16 %v62
    %v134 = vunpack.c.l.b16 %v63
    %v135 = vunpack.c.l.b16 %v64
    %v136 = vunpack.c.h.b16 %v64
    %v137 = vunpack.c.l.b16 %v65
    %v138 = vunpack.c.l.b16 %v66
    %v139 = vunpack.c.h.b16 %v66
    %v140 = vunpack.c.l.b16 %v67
    %v141 = vunpack.c.l.b16 %v68
    %v142 = vunpack.c.h.b16 %v68
    %v143 = vunpack.c.l.b16 %v69
    %v144 = vunpack.c.l.b16 %v70
    %v145 = vunpack.c.h.b16 %v70
    %v146 = vunpack.c.l.b16 %v71
    %v147 = vunpack.c.l.b16 %v72
    %v148 = vunpack.c.h.b16 %v72
    %v149 = vunpack.c.l.b16 %v73
    %v150 = vunpack.c.l.b16 %v74
    %v151 = vunpack.c.h.b16 %v74
    %v152 = vunpack.c.l.b16 %v75
    %v153 = vunpack.c.l.b16 %v76
    %v154 = vunpack.c.h.b16 %v76
    %v155 = vunpack.c.l.b16 %v77
    %v156 = vunpack.c.l.b16 %v78
    %v157 = vunpack.c.h.b16 %v78
    %v158 = vunpack.c.l.b16 %v79
    %v159 = vunpack.c.l.b16 %v80
    %v160 = vunpack.c.h.b16 %v80
    %v161 = vunpack.c.l.b16 %v81
    %v162 = vunpack.c.l.b16 %v82
    %v163 = vunpack.c.h.b16 %v82
    %v164 = vunpack.c.l.b16 %v83
    %v165 = vunpack.c.l.b16 %v84
    %v166 = vunpack.c.h.b16 %v84
    %v167 = vunpack.c.l.b16 %v85
    %v168 = vunpack.c.l.b16 %v86
    %v169 = vunpack.c.h.b16 %v86
    %v170 = vunpack.c.l.b16 %v87
    %v171 = vunpack.c.l.b16 %v88
    %v172 = vunpack.c.h.b16 %v88
    %v173 = vunpack.c.l.b16 %v89
    %v174 = vunpack.c.l.b16 %v90
    %v175 = vunpack.c.h.b16 %v90
    %v176 = vunpack.c.l.b16 %v91
    %v177 = vunpack.c.l.b16 %v92
    %v178 = vunpack.c.h.b16 %v92
    %v179 = vunpack.c.l.b16 %v93
    %v180 = vpack.c.b16 %v135, %v132
    %v181 = vpack.c.b16 %v136, %v133
    %v182 = vpack.c.b16 %v137, %v134
    %v183 = vpack.c.b16 %v141, %v138
    %v184 = vpack.c.b16 %v142, %v139
    %v185 = vpack.c.b16 %v143, %v140
    %v186 = vpack.c.b16 %v147, %v144
    %v187 = vpack.c.b16 %v148, %v145
    %v188 = vpack.c.b16 %v149, %v146
    %v189 = vpack.c.b16 %v153, %v150
    %v190 = vpack.c.b16 %v154, %v151
    %v191 = vpack.c.b16 %v155, %v152
    %v192 = vpack.c.b16 %v159, %v156
    %v193 = vpack.c.b16 %v160, %v157
    %v194 = vpack.c.b16 %v161, %v158
    %v195 = vpack.c.b16 %v165, %v162
    %v196 = vpack.c.b16 %v166, %v163
    %v197 = vpack.c.b16 %v167, %v164
    %v198 = vpack.c.b16 %v171, %v168
    %v199 = vpack.c.b16 %v172, %v169
    %v200 = vpack.c.b16 %v173, %v170
    %v201 = vpack.c.b16 %v177, %v174
    %v202 = vpack.c.b16 %v178, %v175
    %v203 = vpack.c.b16 %v179, %v176
    %228 = vmatprep.subr.bf16.mxu0 %v181
    %229 = vmatpush1.bf16.msra.mxu0 %v180
    %230 = vmatprep.subr.bf16.mxu0 %v184
    %231 = vmatpush1.bf16.msra.mxu0 %v183
    %232 = vmatprep.subr.bf16.mxu0 %v187
    %233 = vmatpush1.bf16.msra.mxu0 %v186
    %234 = vmatprep.subr.bf16.mxu0 %v190
    %235 = vmatpush1.bf16.msra.mxu0 %v189
    %236 = vmatprep.subr.bf16.mxu0 %v193
    %237 = vmatpush1.bf16.msra.mxu0 %v192
    %238 = vmatprep.subr.bf16.mxu0 %v196
    %239 = vmatpush1.bf16.msra.mxu0 %v195
    %240 = vmatprep.subr.bf16.mxu0 %v199
    %241 = vmatpush1.bf16.msra.mxu0 %v198
    %242 = vmatprep.subr.bf16.mxu0 %v202
    %243 = vmatpush1.bf16.msra.mxu0 %v201
    %244 = vmatprep.subr.bf16.mxu0 0
    %245 = vmatpush1.bf16.msra.mxu0 0
    %246 = vmatprep.subr.bf16.mxu0 0
    %247 = vmatpush1.bf16.msra.mxu0 0
    %248 = vmatprep.subr.bf16.mxu0 0
    %249 = vmatpush1.bf16.msra.mxu0 0
    %250 = vmatprep.subr.bf16.mxu0 0
    %251 = vmatpush1.bf16.msra.mxu0 0
    %252 = vmatprep.subr.bf16.mxu0 0
    %253 = vmatpush1.bf16.msra.mxu0 0
    %254 = vmatprep.subr.bf16.mxu0 0
    %255 = vmatpush1.bf16.msra.mxu0 0
    %256 = vmatprep.subr.bf16.mxu0 0
    %257 = vmatpush1.bf16.msra.mxu0 0
    %258 = vmatprep.subr.bf16.mxu0 0
    %259 = vmatpush1.bf16.msra.mxu0 0
    %260 = vmatprep.mubr.bf16.mxu0 0
    %261 = vmatmul.mubr.bf16.gmra.mrb[0].mxu0 %v98
    %v262 = vpop.f32.mrb[0].mxu0
    %v263 = vadd.f32 0.0, %v262
    %v264 = vpop.f32.mrb[0].mxu0
    %v265 = vadd.f32 0.0, %v264
    %v266 = vpop.f32.mrb[0].mxu0
    %v267 = vadd.f32 0.0, %v266
    %v268 = vpop.f32.mrb[0].mxu0
    %v269 = vadd.f32 0.0, %v268
    %270 = vdwg.mxu0
    %271 = vmatprep.subr.bf16.mxu0 0
    %272 = vmatpush1.bf16.msra.mxu0 %v182
    %273 = vmatprep.subr.bf16.mxu0 0
    %274 = vmatpush1.bf16.msra.mxu0 %v185
    %275 = vmatprep.subr.bf16.mxu0 0
    %276 = vmatpush1.bf16.msra.mxu0 %v188
    %277 = vmatprep.subr.bf16.mxu0 0
    %278 = vmatpush1.bf16.msra.mxu0 %v191
    %279 = vmatprep.subr.bf16.mxu0 0
    %280 = vmatpush1.bf16.msra.mxu0 %v194
    %281 = vmatprep.subr.bf16.mxu0 0
    %282 = vmatpush1.bf16.msra.mxu0 %v197
    %283 = vmatprep.subr.bf16.mxu0 0
    %284 = vmatpush1.bf16.msra.mxu0 %v200
    %285 = vmatprep.subr.bf16.mxu0 0
    %286 = vmatpush1.bf16.msra.mxu0 %v203
    %287 = vmatprep.subr.bf16.mxu0 0
    %288 = vmatpush1.bf16.msra.mxu0 0
    %289 = vmatprep.subr.bf16.mxu0 0
    %290 = vmatpush1.bf16.msra.mxu0 0
    %291 = vmatprep.subr.bf16.mxu0 0
    %292 = vmatpush1.bf16.msra.mxu0 0
    %293 = vmatprep.subr.bf16.mxu0 0
    %294 = vmatpush1.bf16.msra.mxu0 0
    %295 = vmatprep.subr.bf16.mxu0 0
    %296 = vmatpush1.bf16.msra.mxu0 0
    %297 = vmatprep.subr.bf16.mxu0 0
    %298 = vmatpush1.bf16.msra.mxu0 0
    %299 = vmatprep.subr.bf16.mxu0 0
    %300 = vmatpush1.bf16.msra.mxu0 0
    %301 = vmatprep.subr.bf16.mxu0 0
    %302 = vmatpush1.bf16.msra.mxu0 0
    %303 = vmatprep.mubr.bf16.mxu0 0
    %304 = vmatmul.mubr.bf16.gmra.mrb[0].mxu0 %v98
    %v305 = vpop.f32.mrb[0].mxu0
    %v306 = vadd.f32 0.0, %v305
    %v307 = vpop.f32.mrb[0].mxu0
    %v308 = vpop.f32.mrb[0].mxu0
    %v309 = vadd.f32 0.0, %v308
    %v310 = vpop.f32.mrb[0].mxu0
    %311 = vdwg.mxu0
    %v312 = vadd.f32 %v54, %v263
    %v313 = vadd.f32 %v55, %v265
    %v314 = vadd.f32 %v56, %v306
    %v315 = vadd.f32 %v57, %v267
    %v316 = vadd.f32 %v58, %v269
    %v317 = vadd.f32 %v59, %v309
    %318 = vst [vmem:[#allocation2] sm:$0xff] %v312
    %319 = vst [vmem:[#allocation2 + $0x8] sm:$0xff] %v313
    %320 = vst [vmem:[#allocation2 + $0x10] sm:$0xff] %v314
    %321 = vst [vmem:[#allocation2 + $0x18] sm:$0xff] %v315
    %322 = vst [vmem:[#allocation2 + $0x20] sm:$0xff] %v316
    %323 = vst [vmem:[#allocation2 + $0x28] sm:$0xff] %v317
    // Predicated region
    $region26: #{tpu_custom_call.1} parent=1 // pred_check
      %p324 = pneg %p44
    $region27: #{tpu_custom_call.1} parent=1 // pred_check_branch
      %326 = sbr.rel (%p324) target = $region29
    $region28: #{tpu_custom_call.1} parent=1 // pred_region
      %v327 = vld [vmem:[#allocation2] sm:$0xff]
      %v328 = vld [vmem:[#allocation2 + $0x8] sm:$0xff]
      %v329 = vld [vmem:[#allocation2 + $0x10] sm:$0xff]
      %v330 = vld [vmem:[#allocation2 + $0x18] sm:$0xff]
      %v331 = vld [vmem:[#allocation2 + $0x20] sm:$0xff]
      %v332 = vld [vmem:[#allocation2 + $0x28] sm:$0xff]
      %v333 = vld [vmem:[%s2] sm:$0x7]
      %v335 = vlaneseq
      %v336 = vshrl.u32 %v335, 7
      %v337 = vsub.s32 0, %v336
      %v338 = vrot.slane %v333, %v337
      %v339 = vlaneseq
      %v340 = vshrl.u32 %v339, 7
      %v341 = vsub.s32 1, %v340
      %v342 = vrot.slane %v333, %v341
      %v343 = vlaneseq
      %v344 = vshrl.u32 %v343, 7
      %v345 = vsub.s32 2, %v344
      %v346 = vrot.slane %v333, %v345
      %v350 = vadd.f32 %v327, %v338
      %v351 = vadd.f32 %v328, %v342
      %v352 = vadd.f32 %v329, %v346
      %v353 = vadd.f32 %v330, %v338
      %v354 = vadd.f32 %v331, %v342
      %v355 = vadd.f32 %v332, %v346
      %v356 = vpack.c.bf16 %v353, %v350
      %v357 = vpack.c.bf16 %v354, %v351
      %v358 = vpack.c.bf16 %v355, %v352
      %v362 = vunpack.c.l.b16 %v356
      %v363 = vunpack.c.l.b16 %v357
      %v364 = vunpack.c.l.b16 %v358
      %v365 = vunpack.c.h.b16 %v356
      %v366 = vunpack.c.h.b16 %v357
      %v367 = vunpack.c.h.b16 %v358
      %v368 = vpack.c.b16 %v363, %v362
      %v369 = vpack.c.b16 %v364, %v364
      %v370 = vpack.c.b16 %v366, %v365
      %v371 = vpack.c.b16 %v367, %v367
      %376 = vst [vmem:[#allocation8] sm:$0xff] %v368
      %377 = vst [vmem:[#allocation8 + $0x8] sm:$0xf] %v369
      %378 = vst [vmem:[#allocation8 + $0xc] sm:$0xff] %v370
      %379 = vst [vmem:[#allocation8 + $0x14] sm:$0xf] %v371
    $region29: #{tpu_custom_call.1} parent=1 // pred_fallthru
      _
    // Predicated region
    $region30: #{tpu_custom_call.1} parent=1 // pred_check
      _
    $region31: #{tpu_custom_call.1} parent=1 // pred_check_branch
      %381 = sbr.rel (0) target = $region33
    $region32: #{tpu_custom_call.1} parent=1 // pred_region
      %s383 = ssub.s32 384, 384
      %384 = vsyncadd [#allocation5], %s383
      %s385 = sshll.u32 [#allocation8], 4
      %s386 = int_to_ptr.vmem [resolvable:$true] %s385
      %391 = dma.vmem_to_hbm [thread:$0]  %s386, 384, %s3, [#allocation5], 192, 192, 12
    $region33: #{tpu_custom_call.1} parent=1 // pred_fallthru
      _
    // Predicated region
    $region34: #{tpu_custom_call.1} parent=1 // pred_check
      _
    $region35: #{tpu_custom_call.1} parent=1 // pred_check_branch
      %393 = sbr.rel (0) target = $region37
    $region36: #{tpu_custom_call.1} parent=1 // pred_region
      %394 = dma.done [#allocation5], 384
    $region37: #{tpu_custom_call.1} parent=1 // pred_fallthru
      _
    %395 = vsyncpa [#allocation4], 1
    %396 = vsyncpa [#allocation7], 1
    %397 = vsyncpa [#allocation5], 1

</llo_original>
